<compile_context>
chip_gen: v5e
topology: v5e:2x2
jax: 0.10.0
libtpu: 0.0.40
codegen_flags: <defaults>
</compile_context>

<pallas_src>
import functools

import jax
import jax.numpy as jnp
from jax.experimental import pallas as pl
from jax.experimental.pallas import tpu as pltpu

IGNORE_INDEX = -100


def _focal_loss_partial_kernel(logits_ref, target_ref, out_ref,
                               acc_ref, cnt_ref, *, n_rows):
    p = pl.program_id(0)          # partition (parallel) axis
    i = pl.program_id(1)          # inner streaming (reduction) axis
    # Unclamped global block index: clamped blocks (index_map min'ed to the
    # last real block) produce rows >= n_rows here and are fully masked.
    blk = p * pl.num_programs(1) + i

    @pl.when(i == 0)
    def _init():
        acc_ref[...] = jnp.zeros_like(acc_ref)
        cnt_ref[...] = jnp.zeros_like(cnt_ref)

    logits = logits_ref[...].astype(jnp.float32)              # (TM, C)
    tgt = target_ref[...]                                      # (TM, 1) int32
    tm, c = logits.shape

    # rows that actually exist (grid/tile padding) and are not ignore_index
    row = jax.lax.broadcasted_iota(jnp.int32, (tm, 1), 0) + blk * tm
    valid = jnp.logical_and(row < n_rows, tgt != IGNORE_INDEX)  # (TM, 1) bool

    # numerically stable per-row cross entropy
    row_max = jnp.max(logits, axis=-1, keepdims=True)           # (TM, 1)
    shifted = logits - row_max                                    # (TM, C)
    lse = jnp.log(jnp.sum(jnp.exp(shifted), axis=-1, keepdims=True))
    col = jax.lax.broadcasted_iota(jnp.int32, (tm, c), 1)        # (TM, C)
    logit_t = jnp.sum(jnp.where(col == tgt, shifted, 0.0),
                      axis=-1, keepdims=True)                    # (TM, 1)
    ce = lse - logit_t                                           # (TM, 1)

    # select (not multiply) so padded / garbage rows cannot produce NaN * 0
    acc_ref[...] += jnp.where(valid, ce, 0.0)
    cnt_ref[...] += valid.astype(jnp.float32)

    @pl.when(i == pl.num_programs(1) - 1)
    def _finalize():
        total = jnp.sum(acc_ref[...])
        count = jnp.sum(cnt_ref[...])
        # tile-aligned, lane-dense partial block: row 0 = total CE, row 1 = count
        r = jax.lax.broadcasted_iota(jnp.int32, out_ref.shape, 1)
        out_ref[...] = jnp.where(r == 0, total,
                                 jnp.where(r == 1, count, 0.0))


def _pick_block_rows(n, c, itemsize, budget_bytes):
    # sublane packing multiple for the logits dtype (f32:8, bf16:16, int8/fp8:32)
    mult = {4: 8, 2: 16, 1: 32}.get(itemsize, 8)
    # size by bytes only: grow until the logits block hits the budget
    tm = (budget_bytes // max(1, c * itemsize)) // mult * mult
    n_padded = -(-n // mult) * mult
    return max(mult, min(tm, n_padded))


def focal_loss(logits, targets, *, gamma=0.0, block_rows=None,
               block_bytes=4 * 1024 * 1024, num_partitions=None):
    """logits: (N, C) float (any dtype), targets: (N,) int. Returns scalar."""
    n, c = logits.shape
    targets_2d = targets.reshape(n, 1).astype(jnp.int32)
    itemsize = jnp.dtype(logits.dtype).itemsize

    tm = (block_rows if block_rows is not None
          else _pick_block_rows(n, c, itemsize, block_bytes))
    blocks_total = -(-n // tm)

    # split the batch across (up to) 2 TensorCores; serial no-op on v5e/v6e
    p_req = 2 if num_partitions is None else int(num_partitions)
    nparts = max(1, min(p_req, blocks_total))
    inner = -(-blocks_total // nparts)
    last_blk = blocks_total - 1

    # out-of-range steps of the last partition clamp to the last real block;
    # the kernel masks them out via the unclamped global row index.
    def in_map(p, i):
        return (jnp.minimum(p * inner + i, last_blk), 0)

    def out_map(p, i):
        return (p, 0, 0)

    # double-buffered footprint: logits + targets tiles, scratch, out block
    vmem_bytes = (2 * tm * c * itemsize        # logits tiles (x2 buffers)
                  + 2 * tm * 4                 # target tiles
                  + 2 * tm * 4                 # (TM,1) f32 scratch x2
                  + 2 * 8 * 128 * 4            # output block
                  + (2 << 20))                 # headroom
    vmem_limit = int(max(16 * 1024 * 1024, vmem_bytes))

    cost = pl.CostEstimate(
        flops=6 * n * c,
        transcendentals=n * c + n,
        bytes_accessed=n * c * itemsize + n * 4 + nparts * 8 * 128 * 4,
    )

    partials = pl.pallas_call(
        functools.partial(_focal_loss_partial_kernel, n_rows=n),
        out_shape=jax.ShapeDtypeStruct((nparts, 8, 128), jnp.float32),
        grid_spec=pltpu.PrefetchScalarGridSpec(
            num_scalar_prefetch=0,
            grid=(nparts, inner),
            in_specs=[
                pl.BlockSpec((tm, c), in_map),    # logits tile
                pl.BlockSpec((tm, 1), in_map),    # targets tile
            ],
            out_specs=pl.BlockSpec((1, 8, 128), out_map),
            scratch_shapes=[pltpu.VMEM((tm, 1), jnp.float32),   # running CE per row
                            pltpu.VMEM((tm, 1), jnp.float32)],  # running count per row
        ),
        compiler_params=pltpu.CompilerParams(
            dimension_semantics=("parallel", "arbitrary"),
            vmem_limit_bytes=vmem_limit),
        cost_estimate=cost,
    )(logits, targets_2d)

    # combine per-core partials + focal transform in the wrapper (tiny scalar ops)
    total = jnp.sum(partials[:, 0, 0])
    count = jnp.sum(partials[:, 1, 0])
    logp = total / count            # count == 0 -> NaN, matching PyTorch
    p = jnp.exp(-logp)
    return (1.0 - p) ** gamma * logp


def _reference_focal_loss(logits, targets, gamma=0.0):
    # pure-JAX reference matching torch.nn.CrossEntropyLoss(reduction='mean',
    # ignore_index=-100) followed by the focal transform.
    logits = logits.astype(jnp.float32)
    logz = jax.nn.logsumexp(logits, axis=-1)
    safe_t = jnp.where(targets == IGNORE_INDEX, 0, targets)
    logit_t = jnp.take_along_axis(logits, safe_t[:, None], axis=-1)[:, 0]
    ce = logz - logit_t
    valid = (targets != IGNORE_INDEX).astype(jnp.float32)
    logp = jnp.sum(ce * valid) / jnp.sum(valid)
    p = jnp.exp(-logp)
    return (1.0 - p) ** gamma * logp


if __name__ == "__main__":
    key = jax.random.PRNGKey(0)
    k1, k2 = jax.random.split(key)

    N, C = 36, 32                      # small (batch, num_classes); N % 8 != 0
    gamma = 2.0                        # exercise the focal term (default is 0)

    logits = jax.random.normal(k1, (N, C), dtype=jnp.float32)
    targets = jax.random.randint(k2, (N,), 0, C, dtype=jnp.int32)
    targets = targets.at[3].set(IGNORE_INDEX)   # exercise ignore_index

    # small block_rows -> multi-step grid, dual-partition split, padded tail
    loss = focal_loss(logits, targets, gamma=gamma, block_rows=8)
    jax.block_until_ready(loss)
    ref = _reference_focal_loss(logits, targets, gamma=gamma)
    assert jnp.allclose(loss, ref, rtol=1e-5, atol=1e-6), (loss, ref)

    # gamma = 0 path (pure mean CE), auto-picked (byte-budgeted) block size
    loss0 = focal_loss(logits, targets, gamma=0.0)
    jax.block_until_ready(loss0)
    ref0 = _reference_focal_loss(logits, targets, gamma=0.0)
    assert jnp.allclose(loss0, ref0, rtol=1e-5, atol=1e-6), (loss0, ref0)

    # native-bf16 path (no wrapper upcast), auto-picked block size
    logits_bf16 = logits.astype(jnp.bfloat16)
    loss_bf16 = focal_loss(logits_bf16, targets, gamma=gamma)
    jax.block_until_ready(loss_bf16)
    ref_bf16 = _reference_focal_loss(logits_bf16, targets, gamma=gamma)
    assert jnp.allclose(loss_bf16, ref_bf16, rtol=1e-4, atol=1e-5), (loss_bf16, ref_bf16)

    print("KERNEL_OK")
</pallas_src>

<mosaic_0001>
module attributes {stable_mosaic.version = 11 : i64} {
  func.func @_focal_loss_partial_kernel(%arg0: i32, %arg1: i32, %arg2: memref<8x32xf32, #tpu.memory_space<vmem>>, %arg3: memref<8x1xi32, #tpu.memory_space<vmem>>, %arg4: memref<1x8x128xf32, #tpu.memory_space<vmem>>, %arg5: memref<8x1xf32, #tpu.memory_space<vmem>>, %arg6: memref<8x1xf32, #tpu.memory_space<vmem>>) attributes {dimension_semantics = [#tpu.dimension_semantics<parallel>, #tpu.dimension_semantics<arbitrary>], iteration_bounds = array<i64: 2, 3>, scalar_prefetch = 0 : i64, scratch_operands = 2 : i64, tpu.core_type = #tpu.core_type<tc>, window_params = [{transform_indices = @transform_0, window_bounds = array<i64: 8, 32>}, {transform_indices = @transform_1, window_bounds = array<i64: 8, 1>}, {transform_indices = @transform_2, window_bounds = array<i64: 1, 8, 128>}]} {
    %c3_i32 = arith.constant 3 : i32
    %0 = arith.muli %arg0, %c3_i32 : i32
    %1 = arith.addi %0, %arg1 : i32
    %c0_i32 = arith.constant 0 : i32
    %2 = arith.cmpi eq, %arg1, %c0_i32 : i32
    %3 = arith.extui %2 : i1 to i32
    %c0_i32_0 = arith.constant 0 : i32
    %4 = arith.cmpi ne, %3, %c0_i32_0 : i32
    scf.if %4 {
      %cst_17 = arith.constant 0.000000e+00 : f32
      %45 = vector.broadcast %cst_17 : f32 to vector<8x1xf32>
      %c0_18 = arith.constant 0 : index
      %c0_19 = arith.constant 0 : index
      %46 = vector.load %arg5[%c0_18, %c0_19] : memref<8x1xf32, #tpu.memory_space<vmem>>, vector<8x1xf32>
      tpu.vector_store %arg5[%c0_18, %c0_19], %45 {strides = array<i32>} : memref<8x1xf32, #tpu.memory_space<vmem>>, vector<8x1xf32>,
      %cst_20 = arith.constant 0.000000e+00 : f32
      %47 = vector.broadcast %cst_20 : f32 to vector<8x1xf32>
      %c0_21 = arith.constant 0 : index
      %c0_22 = arith.constant 0 : index
      %48 = vector.load %arg6[%c0_21, %c0_22] : memref<8x1xf32, #tpu.memory_space<vmem>>, vector<8x1xf32>
      tpu.vector_store %arg6[%c0_21, %c0_22], %47 {strides = array<i32>} : memref<8x1xf32, #tpu.memory_space<vmem>>, vector<8x1xf32>,
    } else {
    }
    %c0 = arith.constant 0 : index
    %c0_1 = arith.constant 0 : index
    %5 = vector.load %arg2[%c0, %c0_1] : memref<8x32xf32, #tpu.memory_space<vmem>>, vector<8x32xf32>
    %c0_2 = arith.constant 0 : index
    %c0_3 = arith.constant 0 : index
    %6 = vector.load %arg3[%c0_2, %c0_3] : memref<8x1xi32, #tpu.memory_space<vmem>>, vector<8x1xi32>
    %7 = tpu.iota {dimensions = array<i32: 0>} : vector<8x1xi32>
    %c8_i32 = arith.constant 8 : i32
    %8 = arith.muli %1, %c8_i32 : i32
    %9 = vector.broadcast %8 : i32 to vector<8x1xi32>
    %10 = arith.addi %7, %9 : vector<8x1xi32>
    %c36_i32 = arith.constant 36 : i32
    %11 = vector.broadcast %c36_i32 : i32 to vector<8x1xi32>
    %12 = arith.cmpi slt, %10, %11 : vector<8x1xi32>
    %c-100_i32 = arith.constant -100 : i32
    %13 = vector.broadcast %c-100_i32 : i32 to vector<8x1xi32>
    %14 = arith.cmpi ne, %6, %13 : vector<8x1xi32>
    %15 = arith.andi %12, %14 : vector<8x1xi1>
    %cst = arith.constant dense<0xFF800000> : vector<8xf32>
    %16 = vector.multi_reduction <maximumf>, %5, %cst [1] : vector<8x32xf32> to vector<8xf32>
    %17 = vector.shape_cast %16 : vector<8xf32> to vector<8x1xf32>
    %18 = vector.broadcast %17 : vector<8x1xf32> to vector<8x32xf32>
    %19 = arith.subf %5, %18 : vector<8x32xf32>
    %20 = math.exp %19 : vector<8x32xf32>
    %cst_4 = arith.constant dense<0.000000e+00> : vector<8xf32>
    %21 = vector.multi_reduction <add>, %20, %cst_4 [1] : vector<8x32xf32> to vector<8xf32>
    %22 = vector.shape_cast %21 : vector<8xf32> to vector<8x1xf32>
    %23 = math.log %22 : vector<8x1xf32>
    %24 = tpu.iota {dimensions = array<i32: 1>} : vector<8x32xi32>
    %25 = vector.broadcast %6 : vector<8x1xi32> to vector<8x32xi32>
    %26 = arith.cmpi eq, %24, %25 : vector<8x32xi32>
    %cst_5 = arith.constant 0.000000e+00 : f32
    %27 = vector.broadcast %cst_5 : f32 to vector<8x32xf32>
    %28 = arith.select %26, %19, %27 : vector<8x32xi1>, vector<8x32xf32>
    %cst_6 = arith.constant dense<0.000000e+00> : vector<8xf32>
    %29 = vector.multi_reduction <add>, %28, %cst_6 [1] : vector<8x32xf32> to vector<8xf32>
    %30 = vector.shape_cast %29 : vector<8xf32> to vector<8x1xf32>
    %31 = arith.subf %23, %30 : vector<8x1xf32>
    %c0_7 = arith.constant 0 : index
    %c0_8 = arith.constant 0 : index
    %32 = vector.load %arg5[%c0_7, %c0_8] : memref<8x1xf32, #tpu.memory_space<vmem>>, vector<8x1xf32>
    %cst_9 = arith.constant 0.000000e+00 : f32
    %33 = vector.broadcast %cst_9 : f32 to vector<8x1xf32>
    %34 = arith.select %15, %31, %33 : vector<8x1xi1>, vector<8x1xf32>
    %35 = arith.addf %32, %34 : vector<8x1xf32>
    %c0_10 = arith.constant 0 : index
    %c0_11 = arith.constant 0 : index
    %36 = vector.load %arg5[%c0_10, %c0_11] : memref<8x1xf32, #tpu.memory_space<vmem>>, vector<8x1xf32>
    tpu.vector_store %arg5[%c0_10, %c0_11], %35 {strides = array<i32>} : memref<8x1xf32, #tpu.memory_space<vmem>>, vector<8x1xf32>,
    %c0_12 = arith.constant 0 : index
    %c0_13 = arith.constant 0 : index
    %37 = vector.load %arg6[%c0_12, %c0_13] : memref<8x1xf32, #tpu.memory_space<vmem>>, vector<8x1xf32>
    %38 = arith.extui %15 : vector<8x1xi1> to vector<8x1xi32>
    %39 = arith.sitofp %38 : vector<8x1xi32> to vector<8x1xf32>
    %40 = arith.addf %37, %39 : vector<8x1xf32>
    %c0_14 = arith.constant 0 : index
    %c0_15 = arith.constant 0 : index
    %41 = vector.load %arg6[%c0_14, %c0_15] : memref<8x1xf32, #tpu.memory_space<vmem>>, vector<8x1xf32>
    tpu.vector_store %arg6[%c0_14, %c0_15], %40 {strides = array<i32>} : memref<8x1xf32, #tpu.memory_space<vmem>>, vector<8x1xf32>,
    %c2_i32 = arith.constant 2 : i32
    %42 = arith.cmpi eq, %arg1, %c2_i32 : i32
    %43 = arith.extui %42 : i1 to i32
    %c0_i32_16 = arith.constant 0 : i32
    %44 = arith.cmpi ne, %43, %c0_i32_16 : i32
    scf.if %44 {
      %c0_17 = arith.constant 0 : index
      %c0_18 = arith.constant 0 : index
      %45 = vector.load %arg5[%c0_17, %c0_18] : memref<8x1xf32, #tpu.memory_space<vmem>>, vector<8x1xf32>
      %46 = vector.shape_cast %45 : vector<8x1xf32> to vector<1x8x1xf32>
      %cst_19 = arith.constant dense<0.000000e+00> : vector<1xf32>
      %47 = vector.multi_reduction <add>, %46, %cst_19 [1, 2] : vector<1x8x1xf32> to vector<1xf32>
      %48 = vector.shape_cast %47 : vector<1xf32> to vector<1x1x1xf32>
      %49 = vector.extract %48[0, 0, 0] : f32 from vector<1x1x1xf32>
      %c0_20 = arith.constant 0 : index
      %c0_21 = arith.constant 0 : index
      %50 = vector.load %arg6[%c0_20, %c0_21] : memref<8x1xf32, #tpu.memory_space<vmem>>, vector<8x1xf32>
      %51 = vector.shape_cast %50 : vector<8x1xf32> to vector<1x8x1xf32>
      %cst_22 = arith.constant dense<0.000000e+00> : vector<1xf32>
      %52 = vector.multi_reduction <add>, %51, %cst_22 [1, 2] : vector<1x8x1xf32> to vector<1xf32>
      %53 = vector.shape_cast %52 : vector<1xf32> to vector<1x1x1xf32>
      %54 = vector.extract %53[0, 0, 0] : f32 from vector<1x1x1xf32>
      %55 = tpu.iota {dimensions = array<i32: 1>} : vector<1x8x128xi32>
      %c0_i32_23 = arith.constant 0 : i32
      %56 = vector.broadcast %c0_i32_23 : i32 to vector<1x8x128xi32>
      %57 = arith.cmpi eq, %55, %56 : vector<1x8x128xi32>
      %c1_i32 = arith.constant 1 : i32
      %58 = vector.broadcast %c1_i32 : i32 to vector<1x8x128xi32>
      %59 = arith.cmpi eq, %55, %58 : vector<1x8x128xi32>
      %cst_24 = arith.constant 0.000000e+00 : f32
      %60 = vector.broadcast %54 : f32 to vector<1x8x128xf32>
      %61 = vector.broadcast %cst_24 : f32 to vector<1x8x128xf32>
      %62 = arith.select %59, %60, %61 : vector<1x8x128xi1>, vector<1x8x128xf32>
      %63 = vector.broadcast %49 : f32 to vector<1x8x128xf32>
      %64 = arith.select %57, %63, %62 : vector<1x8x128xi1>, vector<1x8x128xf32>
      %c0_25 = arith.constant 0 : index
      %c0_26 = arith.constant 0 : index
      %c0_27 = arith.constant 0 : index
      %65 = vector.load %arg4[%c0_25, %c0_26, %c0_27] : memref<1x8x128xf32, #tpu.memory_space<vmem>>, vector<1x8x128xf32>
      tpu.vector_store %arg4[%c0_25, %c0_26, %c0_27], %64 {strides = array<i32>} : memref<1x8x128xf32, #tpu.memory_space<vmem>>, vector<1x8x128xf32>,
    } else {
    }
    return
  }
  func.func @transform_0(%arg0: i32, %arg1: i32) -> (i32, i32) {
    %c3_i32 = arith.constant 3 : i32
    %0 = arith.muli %arg0, %c3_i32 : i32
    %1 = arith.addi %0, %arg1 : i32
    %c4_i32 = arith.constant 4 : i32
    %2 = arith.minsi %1, %c4_i32 : i32
    %c0_i32 = arith.constant 0 : i32
    %c0_i32_0 = arith.constant 0 : i32
    return %2, %c0_i32 : i32, i32
  }
  func.func @transform_1(%arg0: i32, %arg1: i32) -> (i32, i32) {
    %c3_i32 = arith.constant 3 : i32
    %0 = arith.muli %arg0, %c3_i32 : i32
    %1 = arith.addi %0, %arg1 : i32
    %c4_i32 = arith.constant 4 : i32
    %2 = arith.minsi %1, %c4_i32 : i32
    %c0_i32 = arith.constant 0 : i32
    %c0_i32_0 = arith.constant 0 : i32
    return %2, %c0_i32 : i32, i32
  }
  func.func @transform_2(%arg0: i32, %arg1: i32) -> (i32, i32, i32) {
    %c0_i32 = arith.constant 0 : i32
    %c0_i32_0 = arith.constant 0 : i32
    %c0_i32_1 = arith.constant 0 : i32
    return %arg0, %c0_i32, %c0_i32_0 : i32, i32, i32
  }
}

</mosaic_0001>

<llo_original>
// kernel: tpu_custom_call.1
$region0: #{tpu_custom_call.1}
  #allocation0 [shape = 'u32[]', space=smem, size = 0x4, offset = 0x4, fixed_abs, tag = 'smem constant byte address 0x4 - core index']
  #allocation1 [shape = 'u32[72,128]{1,0:T(1,128)}', space=vmem, size = 0x9000, scoped, tag = 'internal scratch']
  #allocation2 [shape = 'f32[8,1]{1,0:T(8,128)}', space=vmem, size = 0x1000, scoped, tag = 'scratch operand']
  #allocation3 [shape = 'f32[8,1]{1,0:T(8,128)}', space=vmem, size = 0x1000, scoped, tag = 'scratch operand']
  %s0 = inlined_call_operand.vmem [shape: f32[36,32], index: 0, kind: input, shape index: {}]
  %s1 = inlined_call_operand.vmem [shape: s32[36,1], index: 1, kind: input, shape index: {}]
  %s2 = inlined_call_operand.hbm [shape: f32[2,8,128], index: 2, kind: output, shape index: {}]
  %s3 = sld [smem:[#allocation0]]
  $region49: #{tpu_custom_call.1} parent=0
    _
  %s5 = ssub.s32 1, %s3
  %s6 = scalar_select 0, %s5, %s3
  $region1: #{tpu_custom_call.1} parent=0
    #allocation4 [shape = 'u8[8192]{0}', space=vmem, size = 0x2000, scoped, tag = 'output window, operand 0']
    #allocation5 [shape = 's32[2]{0}', space=sflag, size = 0x8, scoped, tag = 'scoped memory for tpu_custom_call.1']
    %7 = vsyncpa [#allocation5], 0
    %s8 = scalar_lea.sflag [#allocation5], 1
    %9 = vsyncpa %s8, 0
    loop: start=0, step=1, limit=8
    $region2: #{tpu_custom_call.1} parent=1 // loop_pre_header
      _
    $region3: #{tpu_custom_call.1} parent=1 // loop_header
      %s11 = sphi 0, %s15
      %p12 = scmp.ge.s32.totalorder %s11, 8
      %s18 = sphi 0, %s30
      %s19 = sphi 0, %s26
      %s20 = sphi 0, %s18
      %s21 = sphi 0, %s19
      %s22 = sphi 0, %s20
      %s23 = sphi 0, %s21
      %s41 = sphi 0, %s43
      %s44 = sphi 0, %s41
      %s45 = sphi 0, %s44
      %s61 = sphi 0, %s45
      %s75 = sphi 0, %s77
      %s78 = sphi 0, %s75
      %s79 = sphi 0, %s78
      %s95 = sphi 0, %s79
      %s101 = sphi 0, %s103
      %s104 = sphi 0, %s101
      %s105 = sphi 0, %s104
      %s121 = sphi 0, %s105
    $region4: #{tpu_custom_call.1} parent=1 // loop_header_branch
      %14 = sbr.rel (%p12) target = $region8
    $region5: #{tpu_custom_call.1} parent=1 // loop_body
      %s16 = ssub.s32 %s11, 1
      %s17 = ssub.s32 %s11, 2
      %s24 = sadd.s32 1, %s19
      %p25 = scmp.ge.s32.totalorder %s24, 3
      %s26 = scalar_select %p25, 0, %s24
      %s27 = sadd.s32 1, %s18
      %s28 = scalar_select %p25, %s27, %s18
      %p29 = scmp.ge.s32.totalorder %s28, 2
      %s30 = scalar_select %p29, 0, %s28
      %s31 = smul.u32 %s18, 3
      %s32 = sadd.s32 %s31, %s19
      %p33 = scmp.lt.s32.totalorder %s32, 4
      %s34 = scalar_select %p33, %s32, 4
      %s35 = smul.u32 %s30, 3
      %s36 = sadd.s32 %s35, %s26
      %p37 = scmp.lt.s32.totalorder %s36, 4
      %s38 = scalar_select %p37, %s36, 4
      %s39 = ssub.s32 %s34, %s38
      %p40 = scmp.eq.s32.totalorder %s39, 0
      %s42 = sadd.s32 %s41, 1
      %s43 = scalar_select %p40, %s41, %s42
      %p46 = pneg %p40
      %p47 = scmp.eq.s32.totalorder %s11, 5
      %p48 = por %p46, %p47
      %p49 = scmp.ne.s32.totalorder %s41, %s44
      %p50 = scmp.eq.s32.totalorder %s11, 0
      %p51 = por %p49, %p50
      %p52 = scmp.ne.s32.totalorder %s41, %s44
      %p53 = scmp.eq.s32.totalorder %s16, 5
      %p54 = por %p52, %p53
      %p55 = scmp.ne.s32.totalorder %s44, %s45
      %p56 = scmp.eq.s32.totalorder %s16, 0
      %p57 = por %p55, %p56
      %p58 = scmp.ne.s32.totalorder %s44, %s45
      %p59 = scmp.eq.s32.totalorder %s17, 5
      %p60 = por %p58, %p59
      %p62 = scmp.ne.s32.totalorder %s45, %s61
      %p63 = scmp.eq.s32.totalorder %s17, 0
      %p64 = por %p62, %p63
      %s65 = smul.u32 %s18, 3
      %s66 = sadd.s32 %s65, %s19
      %p67 = scmp.lt.s32.totalorder %s66, 4
      %s68 = scalar_select %p67, %s66, 4
      %s69 = smul.u32 %s30, 3
      %s70 = sadd.s32 %s69, %s26
      %p71 = scmp.lt.s32.totalorder %s70, 4
      %s72 = scalar_select %p71, %s70, 4
      %s73 = ssub.s32 %s68, %s72
      %p74 = scmp.eq.s32.totalorder %s73, 0
      %s76 = sadd.s32 %s75, 1
      %s77 = scalar_select %p74, %s75, %s76
      %p80 = pneg %p74
      %p81 = scmp.eq.s32.totalorder %s11, 5
      %p82 = por %p80, %p81
      %p83 = scmp.ne.s32.totalorder %s75, %s78
      %p84 = scmp.eq.s32.totalorder %s11, 0
      %p85 = por %p83, %p84
      %p86 = scmp.ne.s32.totalorder %s75, %s78
      %p87 = scmp.eq.s32.totalorder %s16, 5
      %p88 = por %p86, %p87
      %p89 = scmp.ne.s32.totalorder %s78, %s79
      %p90 = scmp.eq.s32.totalorder %s16, 0
      %p91 = por %p89, %p90
      %p92 = scmp.ne.s32.totalorder %s78, %s79
      %p93 = scmp.eq.s32.totalorder %s17, 5
      %p94 = por %p92, %p93
      %p96 = scmp.ne.s32.totalorder %s79, %s95
      %p97 = scmp.eq.s32.totalorder %s17, 0
      %p98 = por %p96, %p97
      %s99 = ssub.s32 %s18, %s30
      %p100 = scmp.eq.s32.totalorder %s99, 0
      %s102 = sadd.s32 %s101, 1
      %s103 = scalar_select %p100, %s101, %s102
      %p106 = pneg %p100
      %p107 = scmp.eq.s32.totalorder %s11, 5
      %p108 = por %p106, %p107
      %p109 = scmp.ne.s32.totalorder %s101, %s104
      %p110 = scmp.eq.s32.totalorder %s11, 0
      %p111 = por %p109, %p110
      %p112 = scmp.ne.s32.totalorder %s101, %s104
      %p113 = scmp.eq.s32.totalorder %s16, 5
      %p114 = por %p112, %p113
      %p115 = scmp.ne.s32.totalorder %s104, %s105
      %p116 = scmp.eq.s32.totalorder %s16, 0
      %p117 = por %p115, %p116
      %p118 = scmp.ne.s32.totalorder %s104, %s105
      %p119 = scmp.eq.s32.totalorder %s17, 5
      %p120 = por %p118, %p119
      %p122 = scmp.ne.s32.totalorder %s105, %s121
      %p123 = scmp.eq.s32.totalorder %s17, 0
      %p124 = por %p122, %p123
      %p125 = scmp.le.s32.totalorder 1, %s11
      %p126 = scmp.lt.s32.totalorder %s11, 7
      %p127 = pnand %p125, %p126
      %p128 = pneg %p127
      // Predicated region
      $region9: #{tpu_custom_call.1} parent=5 // pred_check
        _
      $region10: #{tpu_custom_call.1} parent=5 // pred_check_branch
        %130 = sbr.rel (%p127) target = $region12
      $region11: #{tpu_custom_call.1} parent=5 // pred_region
        %s131 = ssub.s32 %s11, 1
      $region12: #{tpu_custom_call.1} parent=5 // pred_fallthru
        _
      %p132 = scmp.lt.s32.totalorder %s11, 6
      // Predicated region
      $region13: #{tpu_custom_call.1} parent=5 // pred_check
        %p133 = pneg %p132
      $region14: #{tpu_custom_call.1} parent=5 // pred_check_branch
        %135 = sbr.rel (%p133) target = $region16
      $region15: #{tpu_custom_call.1} parent=5 // pred_region
        // Predicated region
        $region17: #{tpu_custom_call.1} parent=15 // pred_check
          %p136 = pneg %p51
        $region18: #{tpu_custom_call.1} parent=15 // pred_check_branch
          %138 = sbr.rel (%p136) target = $region20
        $region19: #{tpu_custom_call.1} parent=15 // pred_region
          %s139 = smul.u32 %s18, 3
          %s140 = sadd.s32 %s139, %s19
          %p141 = scmp.lt.s32.totalorder %s140, 4
          %s142 = scalar_select %p141, %s140, 4
          %p143 = scmp.lt.s32.totalorder %s142, 4
          %s144 = scalar_select %p143, %s142, 4
          %s145 = smul.addr %s144, 8
          %s146 = scalar_lea.vmem %s0, %s145
          %s147 = smul.u32 %s18, 3
          %s148 = sadd.s32 %s147, %s19
          %p149 = scmp.lt.s32.totalorder %s148, 4
          %s150 = scalar_select %p149, %s148, 4
        $region20: #{tpu_custom_call.1} parent=15 // pred_fallthru
          _
        // Predicated region
        $region21: #{tpu_custom_call.1} parent=15 // pred_check
          %p151 = pneg %p85
        $region22: #{tpu_custom_call.1} parent=15 // pred_check_branch
          %153 = sbr.rel (%p151) target = $region24
        $region23: #{tpu_custom_call.1} parent=15 // pred_region
          %s154 = smul.u32 %s18, 3
          %s155 = sadd.s32 %s154, %s19
          %p156 = scmp.lt.s32.totalorder %s155, 4
          %s157 = scalar_select %p156, %s155, 4
          %p158 = scmp.lt.s32.totalorder %s157, 4
          %s159 = scalar_select %p158, %s157, 4
          %s160 = smul.addr %s159, 8
          %s161 = scalar_lea.vmem %s1, %s160
          %s162 = smul.u32 %s18, 3
          %s163 = sadd.s32 %s162, %s19
          %p164 = scmp.lt.s32.totalorder %s163, 4
          %s165 = scalar_select %p164, %s163, 4
        $region24: #{tpu_custom_call.1} parent=15 // pred_fallthru
          _
      $region16: #{tpu_custom_call.1} parent=5 // pred_fallthru
        _
      %p166 = scmp.le.s32.totalorder 1, %s11
      %p167 = scmp.lt.s32.totalorder %s11, 7
      %p168 = pnand %p166, %p167
      %p169 = pneg %p168
      // Predicated region
      $region25: #{tpu_custom_call.1} parent=5 // pred_check
        _
      $region26: #{tpu_custom_call.1} parent=5 // pred_check_branch
        %171 = sbr.rel (%p168) target = $region28
      $region27: #{tpu_custom_call.1} parent=5 // pred_region
        %s172 = ssub.s32 %s11, 1
        %s173 = smul.u32 %s20, 3
        %s174 = sadd.s32 %s173, %s21
        %p175 = scmp.lt.s32.totalorder %s174, 4
        %s176 = scalar_select %p175, %s174, 4
        %p177 = scmp.lt.s32.totalorder %s176, 4
        %s178 = scalar_select %p177, %s176, 4
        %s179 = smul.addr %s178, 8
        %s180 = scalar_lea.vmem %s0, %s179
        %p181 = pneg %p57
        %p182 = pneg %p54
        %s183 = smul.u32 %s20, 3
        %s184 = sadd.s32 %s183, %s21
        %p185 = scmp.lt.s32.totalorder %s184, 4
        %s186 = scalar_select %p185, %s184, 4
        %p187 = scmp.lt.s32.totalorder %s186, 4
        %s188 = scalar_select %p187, %s186, 4
        %s189 = smul.addr %s188, 8
        %s190 = scalar_lea.vmem %s1, %s189
        %p191 = pneg %p91
        %p192 = pneg %p88
        %p193 = pneg %p117
        %p194 = pneg %p114
        %s195 = sand.u32 %s104, 1
        %s196 = scalar_lea.sflag [#allocation5], %s195
        %s197 = sand.u32 %s104, 1
        %s198 = smul.addr %s197, 8
        %s199 = scalar_lea.vmem [#allocation4], %s198
        %s200 = smul.u32 %s20, 3
        %s201 = sadd.s32 %s200, %s21
        %p202 = scmp.lt.s32.totalorder %s201, 4
        %s203 = scalar_select %p202, %s201, 4
        %p204 = scmp.lt.s32.totalorder %s203, 4
        %s205 = scalar_select %p204, %s203, 4
        %s206 = smul.addr %s205, 8
        %s207 = scalar_lea.vmem %s0, %s206
        %s208 = smul.u32 %s20, 3
        %s209 = sadd.s32 %s208, %s21
        %p210 = scmp.lt.s32.totalorder %s209, 4
        %s211 = scalar_select %p210, %s209, 4
        %s212 = smul.u32 %s20, 3
        %s213 = sadd.s32 %s212, %s21
        %p214 = scmp.lt.s32.totalorder %s213, 4
        %s215 = scalar_select %p214, %s213, 4
        %p216 = scmp.lt.s32.totalorder %s215, 4
        %s217 = scalar_select %p216, %s215, 4
        %s218 = smul.addr %s217, 8
        %s219 = scalar_lea.vmem %s1, %s218
        %s220 = smul.u32 %s20, 3
        %s221 = sadd.s32 %s220, %s21
        %p222 = scmp.lt.s32.totalorder %s221, 4
        %s223 = scalar_select %p222, %s221, 4
        %s224 = smul.u32 %s20, 3
        %s225 = sadd.s32 %s224, %s21
        %p226 = scmp.eq.s32.totalorder %s21, 0
        // Predicated region
        $region29: #{tpu_custom_call.1} parent=27 // pred_check
          %p227 = pneg %p226
        $region30: #{tpu_custom_call.1} parent=27 // pred_check_branch
          %229 = sbr.rel (%p227) target = $region32
        $region31: #{tpu_custom_call.1} parent=27 // pred_region
          %vm230 = vcmask 7168
          %231 = vst.msk [vmem:[#allocation2] sm:$0xff] %vm230, 0.0
          %232 = vst.msk [vmem:[#allocation3] sm:$0xff] %vm230, 0.0
        $region32: #{tpu_custom_call.1} parent=27 // pred_fallthru
          _
        %v233 = vld [vmem:[%s207] sm:$0xff]
        %v234 = vld [vmem:[%s219] sm:$0xff]
        %v235 = vlaneseq
        %v236 = vshrl.u32 %v235, 7
        %s237 = smul.u32 %s225, 8
        %v238 = vstv %s237
        %v239 = vadd.s32 %v236, %v238
        %vm240 = vcmp.lt.s32.totalorder %v239, 36
        %vm241 = vcmp.ne.s32.totalorder %v234, 4294967196
        %vm242 = vmand %vm240, %vm241
        %vm243 = vcmask 261120
        %v244 = vsel %vm243, %v233, -inf
        %245 = vmax.xlane.f32.xlu0 %v244
        %v246 = vpop.xlane.xlu0 %245
        %v247 = vsub.f32 %v233, %v246
        %v248 = vmul.f32 %v247, 1.442695
        %v249 = vpow.pop %v248
        %v250 = vsel %vm243, %v249, 0.0
        %251 = vadd.xlane.f32.xlu0 %v250
        %v252 = vpop.xlane.xlu0 %251
        %v253 = vlog2.pop %v252
        %v254 = vmul.f32 %v253, 0.6931472
        %v255 = vlaneseq
        %v256 = vand.u32 %v255, 127
        %257 = vset.pattern.permute.xlu0 0
        %258 = vperm.xlu0 %257, %v234
        %v259 = vpop.permute.xlu0 %258
        %vm260 = vcmp.eq.s32.totalorder %v256, %v259
        %v261 = vsel %vm260, %v247, 0.0
        %v262 = vsel %vm243, %v261, 0.0
        %263 = vadd.xlane.f32.xlu0 %v262
        %v264 = vpop.xlane.xlu0 %263
        %v265 = vsub.f32 %v254, %v264
        %v266 = vld [vmem:[#allocation2] sm:$0xff]
        %v267 = vsel %vm242, %v265, 0.0
        %v268 = vadd.f32 %v266, %v267
        %vm269 = vcmask 7168
        %270 = vst.msk [vmem:[#allocation2] sm:$0xff] %vm269, %v268
        %v271 = vld [vmem:[#allocation3] sm:$0xff]
        %v272 = vsel %vm242, 1, 0
        %v273 = vcvt.s32.f32 %v272
        %v274 = vadd.f32 %v271, %v273
        %275 = vst.msk [vmem:[#allocation3] sm:$0xff] %vm269, %v274
        %p276 = scmp.eq.s32.totalorder %s21, 2
        // Predicated region
        $region33: #{tpu_custom_call.1} parent=27 // pred_check
          %p277 = pneg %p276
        $region34: #{tpu_custom_call.1} parent=27 // pred_check_branch
          %279 = sbr.rel (%p277) target = $region36
        $region35: #{tpu_custom_call.1} parent=27 // pred_region
          %v280 = vld [vmem:[#allocation2] sm:$0xff]
          %v281 = vsel %vm269, %v280, 0.0
          %282 = vadd.xlane.f32.xlu0 %v281
          %v283 = vpop.xlane.xlu0 %282
          %v284 = vrot.slane %v283, 4
          %v285 = vadd.f32 %v283, %v284
          %v286 = vrot.slane %v285, 2
          %v287 = vadd.f32 %v285, %v286
          %v288 = vrot.slane %v287, 1
          %v289 = vadd.f32 %v287, %v288
          %s290 = vtos %v289
          %v291 = vld [vmem:[#allocation3] sm:$0xff]
          %v292 = vsel %vm269, %v291, 0.0
          %293 = vadd.xlane.f32.xlu0 %v292
          %v294 = vpop.xlane.xlu0 %293
          %v295 = vrot.slane %v294, 4
          %v296 = vadd.f32 %v294, %v295
          %v297 = vrot.slane %v296, 2
          %v298 = vadd.f32 %v296, %v297
          %v299 = vrot.slane %v298, 1
          %v300 = vadd.f32 %v298, %v299
          %s301 = vtos %v300
          %vm302 = vcmp.eq.s32.totalorder %v236, 0
          %vm303 = vcmp.eq.s32.totalorder %v236, 1
          %v304 = vstv %s301
          %v305 = vsel %vm303, %v304, 0.0
          %v306 = vstv %s290
          %v307 = vsel %vm302, %v306, %v305
          %308 = vst [vmem:[%s199] sm:$0xff] %v307
        $region36: #{tpu_custom_call.1} parent=27 // pred_fallthru
          _
        %s309 = sand.u32 %s104, 1
        %s310 = scalar_lea.sflag [#allocation5], %s309
        %s311 = sand.u32 %s104, 1
        %s312 = smul.addr %s311, 8
        %s313 = scalar_lea.vmem [#allocation4], %s312
        // Predicated region
        $region37: #{tpu_custom_call.1} parent=27 // pred_check
          %p314 = pneg %p114
        $region38: #{tpu_custom_call.1} parent=27 // pred_check_branch
          %316 = sbr.rel (%p314) target = $region40
        $region39: #{tpu_custom_call.1} parent=27 // pred_region
          %318 = vsyncadd %s310, 0
          %s319 = smul.addr %s20, 8
          %s320 = scalar_lea.hbm %s2, %s319
          %s322 = sshll.u32 %s313, 4
          %s323 = int_to_ptr.vmem [resolvable:$true] %s322
          %s324 = sshll.u32 %s320, 4
          %s325 = int_to_ptr.hbm [resolvable:$true] %s324
          %327 = dma.vmem_to_hbm [thread:$0]  %s323, 128, %s325, %s310
        $region40: #{tpu_custom_call.1} parent=27 // pred_fallthru
          _
      $region28: #{tpu_custom_call.1} parent=5 // pred_fallthru
        _
      %p328 = scmp.le.s32.totalorder 2, %s11
      // Predicated region
      $region41: #{tpu_custom_call.1} parent=5 // pred_check
        %p329 = pneg %p328
      $region42: #{tpu_custom_call.1} parent=5 // pred_check_branch
        %331 = sbr.rel (%p329) target = $region44
      $region43: #{tpu_custom_call.1} parent=5 // pred_region
        %s332 = ssub.s32 %s11, 2
        // Predicated region
        $region45: #{tpu_custom_call.1} parent=43 // pred_check
          %p333 = pneg %p120
        $region46: #{tpu_custom_call.1} parent=43 // pred_check_branch
          %335 = sbr.rel (%p333) target = $region48
        $region47: #{tpu_custom_call.1} parent=43 // pred_region
          %s336 = sand.u32 %s105, 1
          %s337 = scalar_lea.sflag [#allocation5], %s336
          %s338 = sand.u32 %s105, 1
          %s339 = smul.addr %s338, 8
          %s340 = scalar_lea.vmem [#allocation4], %s339
          %342 = dma.done %s337, 128
        $region48: #{tpu_custom_call.1} parent=43 // pred_fallthru
          _
      $region44: #{tpu_custom_call.1} parent=5 // pred_fallthru
        _
    $region6: #{tpu_custom_call.1} parent=1 // loop_footer
      %s15 = sadd.s32 1, %s11
    $region7: #{tpu_custom_call.1} parent=1 // loop_footer_branch
      %10 = sbr.rel target = $region3
    $region8: #{tpu_custom_call.1} parent=1 // loop_exit
      _
    %343 = vsyncpa [#allocation5], 1
    %s344 = scalar_lea.sflag [#allocation5], 1
    %345 = vsyncpa %s344, 1

</llo_original>
